<compile_context>
chip_gen: v7x
topology: tpu7x:2x2x1
jax: 0.10.0
libtpu: 0.0.40
codegen_flags: <defaults>
</compile_context>

<pallas_src>
import functools

import jax
import jax.numpy as jnp
from jax.experimental import pallas as pl
from jax.experimental.pallas import tpu as pltpu

ALPHA = 0.3
BETA = 0.7
SMOOTH = 1e-06

LANE = 128
TARGET_BLOCK_BYTES = 4 * 1024 * 1024      # ~4 MiB per input block per step
VMEM_LIMIT_BYTES = 48 * 1024 * 1024       # 2 inputs x 2 buffers x 4 MiB << 48 MiB


def _sublane_multiple(dtype) -> int:
    """Minimum legal sublane tile for a dtype: 8 (4-byte), 16 (2-byte), 32 (1-byte)."""
    return max(8, 32 // jnp.dtype(dtype).itemsize)


def _tversky_partial_kernel(yp_ref, yt_ref, tp_ref, sp_ref, st_ref,
                            *, s_rows, ts, g_inner):
    """Accumulate sum(p*t), sum(p), sum(t) for one (batch, split) pair.

    yp_ref / yt_ref : (TS, 128) native-dtype input tiles.
    tp/sp/st_ref    : (1, 128) f32 lane-partial accumulators (output-resident
                      across the innermost 'arbitrary' grid axis).
    """
    split = pl.program_id(1)
    j = pl.program_id(2)
    g = split * g_inner + j                 # unclamped global row-block index

    @pl.when(j == 0)
    def _():
        tp_ref[...] = jnp.zeros_like(tp_ref)
        sp_ref[...] = jnp.zeros_like(sp_ref)
        st_ref[...] = jnp.zeros_like(st_ref)

    # Load native dtype, compute in f32 (halves HBM traffic for bf16 inputs).
    p = jax.nn.sigmoid(yp_ref[...].astype(jnp.float32))    # (TS, LANE)
    t = yt_ref[...].astype(jnp.float32)                    # (TS, LANE)

    valid_rows = s_rows - g * ts            # <= 0 for dead split steps

    def _accumulate(pv, tv):
        # Per-step: VPU adds + one sublane reduce per quantity; the single
        # cross-lane reduction happens once, in the JAX epilogue.
        tp_ref[...] += jnp.sum(pv * tv, axis=0, keepdims=True)
        sp_ref[...] += jnp.sum(pv, axis=0, keepdims=True)
        st_ref[...] += jnp.sum(tv, axis=0, keepdims=True)

    @pl.when(valid_rows >= ts)              # interior block: no masking cost
    def _():
        _accumulate(p, t)

    @pl.when(valid_rows < ts)               # tail / dead block: row-mask
    def _():
        row = jax.lax.broadcasted_iota(jnp.int32, (ts, LANE), 0)
        keep = row < valid_rows
        # where() (not multiply) so stale-buffer NaNs in invalid rows vanish.
        _accumulate(jnp.where(keep, p, 0.0), jnp.where(keep, t, 0.0))


def tversky_loss(y_pred, y_true, alpha=ALPHA, beta=BETA, smooth=SMOOTH,
                 *, max_block_rows=None):
    """Tversky loss. y_pred: (B, ...) logits; y_true: (B, ...) targets.

    Inputs are consumed in their native dtype — feed bf16 logits / bf16 or
    int8 masks to halve or quarter the HBM traffic of this BW-bound kernel.
    """
    B = y_pred.shape[0]
    yp = y_pred.reshape(B, -1)              # copy-free flatten (matches .view(B, -1))
    yt = y_true.reshape(B, -1)
    N = yp.shape[1]

    # --- row geometry -------------------------------------------------------
    S = -(-N // LANE)                       # rows of 128 lanes per batch
    if S * LANE != N:
        # Rare slow path: pad < 128 elems/row so the lane reshape is legal.
        # Sentinel = dtype's most-negative finite value (sigmoid -> 0 exactly);
        # targets pad with 0, so padded lanes contribute nothing to any sum.
        pad = S * LANE - N
        if jnp.issubdtype(yp.dtype, jnp.floating):
            sentinel = float(jnp.finfo(yp.dtype).min)
        else:
            sentinel = int(jnp.iinfo(yp.dtype).min)
        yp = jnp.pad(yp, ((0, 0), (0, pad)), constant_values=sentinel)
        yt = jnp.pad(yt, ((0, 0), (0, pad)), constant_values=0)

    yp3 = yp.reshape(B, S, LANE)            # copy-free when N % 128 == 0
    yt3 = yt.reshape(B, S, LANE)

    # --- block geometry (dtype-aware) ---------------------------------------
    sub_mult = max(_sublane_multiple(yp.dtype), _sublane_multiple(yt.dtype))
    max_itemsize = max(jnp.dtype(yp.dtype).itemsize, jnp.dtype(yt.dtype).itemsize)
    if max_block_rows is None:
        max_block_rows = TARGET_BLOCK_BYTES // (LANE * max_itemsize)
    max_block_rows = max(sub_mult, (max_block_rows // sub_mult) * sub_mult)

    if S <= max_block_rows:
        ts = S                              # single row-block: full-dim, any size
        g_total = 1
    else:
        ts = max_block_rows                 # multiple of sub_mult
        g_total = -(-S // ts)               # last block may be partial

    # Split the reduction axis 2-way when B alone cannot fill both v7x cores.
    nsplit = 2 if (B % 2 == 1 and g_total >= 2) else 1
    g_inner = -(-g_total // nsplit)

    kernel = functools.partial(_tversky_partial_kernel,
                               s_rows=S, ts=ts, g_inner=g_inner)

    def in_index_map(b, s, j):
        # Clamp so dead split steps re-read the last valid block (masked away
        # in-kernel) instead of addressing past the array.
        return (b, jnp.minimum(s * g_inner + j, g_total - 1), 0)

    out_index_map = lambda b, s, j: (b, s, 0, 0)
    out_spec = pl.BlockSpec((None, None, 1, LANE), out_index_map)
    out_struct = jax.ShapeDtypeStruct((B, nsplit, 1, LANE), jnp.float32)

    tp_p, sp_p, st_p = pl.pallas_call(
        kernel,
        out_shape=(out_struct, out_struct, out_struct),
        grid_spec=pltpu.PrefetchScalarGridSpec(
            num_scalar_prefetch=0,
            grid=(B, nsplit, g_inner),
            in_specs=[
                pl.BlockSpec((None, ts, LANE), in_index_map),
                pl.BlockSpec((None, ts, LANE), in_index_map),
            ],
            out_specs=(out_spec, out_spec, out_spec),
        ),
        compiler_params=pltpu.CompilerParams(
            dimension_semantics=("parallel", "parallel", "arbitrary"),
            vmem_limit_bytes=VMEM_LIMIT_BYTES,
        ),
    )(yp3, yt3)

    # --- tiny Tversky epilogue in plain JAX ----------------------------------
    tp = jnp.sum(tp_p, axis=(1, 2, 3))      # (B,)
    sp = jnp.sum(sp_p, axis=(1, 2, 3))
    st = jnp.sum(st_p, axis=(1, 2, 3))
    fp = sp - tp                            # sum((1 - t) * p)
    fn = st - tp                            # sum(t * (1 - p))
    tversky = (tp + smooth) / (tp + alpha * fp + beta * fn + smooth)
    return jnp.mean(1.0 - tversky)


def _reference(y_pred, y_true, alpha=ALPHA, beta=BETA, smooth=SMOOTH):
    B = y_pred.shape[0]
    p = jax.nn.sigmoid(y_pred.astype(jnp.float32)).reshape(B, -1)
    t = y_true.astype(jnp.float32).reshape(B, -1)
    TP = jnp.sum(p * t, axis=1)
    FP = jnp.sum((1.0 - t) * p, axis=1)
    FN = jnp.sum(t * (1.0 - p), axis=1)
    tversky = (TP + smooth) / (TP + alpha * FP + beta * FN + smooth)
    return jnp.mean(1.0 - tversky)


if __name__ == "__main__":
    key = jax.random.PRNGKey(0)
    k1, k2, k3, k4 = jax.random.split(key, 4)

    # Test 1: lane-aligned fast path (copy-free reshape), B = 2.
    B, C, H, W = 2, 4, 16, 16
    yp1 = jax.random.normal(k1, (B, C, H, W), dtype=jnp.float32)             # logits
    yt1 = (jax.random.uniform(k2, (B, C, H, W)) > 0.5).astype(jnp.float32)   # binary mask
    loss1 = jax.block_until_ready(tversky_loss(yp1, yt1))
    ref1 = _reference(yp1, yt1)
    assert jnp.allclose(loss1, ref1, atol=1e-5, rtol=1e-5), (loss1, ref1)

    # Test 2: unaligned N (sentinel lane pad), partial row-block masking, and
    # the 2-way reduction split for B = 1 (small max_block_rows to exercise
    # multi-step accumulation at toy sizes).
    B, C, H, W = 1, 3, 20, 19
    yp2 = jax.random.normal(k3, (B, C, H, W), dtype=jnp.float32)
    yt2 = (jax.random.uniform(k4, (B, C, H, W)) > 0.5).astype(jnp.float32)
    loss2 = jax.block_until_ready(tversky_loss(yp2, yt2, max_block_rows=8))
    ref2 = _reference(yp2, yt2)
    assert jnp.allclose(loss2, ref2, atol=1e-5, rtol=1e-5), (loss2, ref2)

    print("KERNEL_OK")
</pallas_src>

<mosaic_0001>
module attributes {stable_mosaic.version = 11 : i64} {
  func.func @_tversky_partial_kernel(%arg0: i32, %arg1: i32, %arg2: i32, %arg3: memref<1x8x128xf32, #tpu.memory_space<vmem>>, %arg4: memref<1x8x128xf32, #tpu.memory_space<vmem>>, %arg5: memref<1x1x1x128xf32, #tpu.memory_space<vmem>>, %arg6: memref<1x1x1x128xf32, #tpu.memory_space<vmem>>, %arg7: memref<1x1x1x128xf32, #tpu.memory_space<vmem>>) attributes {dimension_semantics = [#tpu.dimension_semantics<parallel>, #tpu.dimension_semantics<parallel>, #tpu.dimension_semantics<arbitrary>], iteration_bounds = array<i64: 2, 1, 1>, scalar_prefetch = 0 : i64, scratch_operands = 0 : i64, tpu.core_type = #tpu.core_type<tc>, window_params = [{transform_indices = @transform_0, window_bounds = array<i64: 1, 8, 128>}, {transform_indices = @transform_1, window_bounds = array<i64: 1, 8, 128>}, {transform_indices = @transform_2, window_bounds = array<i64: 1, 1, 1, 128>}, {transform_indices = @transform_3, window_bounds = array<i64: 1, 1, 1, 128>}, {transform_indices = @transform_4, window_bounds = array<i64: 1, 1, 1, 128>}]} {
    %c1_i32 = arith.constant 1 : i32
    %0 = arith.muli %arg1, %c1_i32 : i32
    %1 = arith.addi %0, %arg2 : i32
    %c0_i32 = arith.constant 0 : i32
    %2 = arith.cmpi eq, %arg2, %c0_i32 : i32
    %3 = arith.extui %2 : i1 to i32
    %c0_i32_0 = arith.constant 0 : i32
    %4 = arith.cmpi ne, %3, %c0_i32_0 : i32
    scf.if %4 {
      %cst_11 = arith.constant 0.000000e+00 : f32
      %22 = vector.broadcast %cst_11 : f32 to vector<1x128xf32>
      %c0_12 = arith.constant 0 : index
      %c0_13 = arith.constant 0 : index
      %c0_14 = arith.constant 0 : index
      %c0_15 = arith.constant 0 : index
      %23 = vector.load %arg5[%c0_12, %c0_13, %c0_14, %c0_15] : memref<1x1x1x128xf32, #tpu.memory_space<vmem>>, vector<1x1x1x128xf32>
      %24 = vector.shape_cast %23 : vector<1x1x1x128xf32> to vector<1x128xf32>
      %25 = vector.shape_cast %22 : vector<1x128xf32> to vector<1x1x1x128xf32>
      tpu.vector_store %arg5[%c0_12, %c0_13, %c0_14, %c0_15], %25 {strides = array<i32>} : memref<1x1x1x128xf32, #tpu.memory_space<vmem>>, vector<1x1x1x128xf32>,
      %cst_16 = arith.constant 0.000000e+00 : f32
      %26 = vector.broadcast %cst_16 : f32 to vector<1x128xf32>
      %c0_17 = arith.constant 0 : index
      %c0_18 = arith.constant 0 : index
      %c0_19 = arith.constant 0 : index
      %c0_20 = arith.constant 0 : index
      %27 = vector.load %arg6[%c0_17, %c0_18, %c0_19, %c0_20] : memref<1x1x1x128xf32, #tpu.memory_space<vmem>>, vector<1x1x1x128xf32>
      %28 = vector.shape_cast %27 : vector<1x1x1x128xf32> to vector<1x128xf32>
      %29 = vector.shape_cast %26 : vector<1x128xf32> to vector<1x1x1x128xf32>
      tpu.vector_store %arg6[%c0_17, %c0_18, %c0_19, %c0_20], %29 {strides = array<i32>} : memref<1x1x1x128xf32, #tpu.memory_space<vmem>>, vector<1x1x1x128xf32>,
      %cst_21 = arith.constant 0.000000e+00 : f32
      %30 = vector.broadcast %cst_21 : f32 to vector<1x128xf32>
      %c0_22 = arith.constant 0 : index
      %c0_23 = arith.constant 0 : index
      %c0_24 = arith.constant 0 : index
      %c0_25 = arith.constant 0 : index
      %31 = vector.load %arg7[%c0_22, %c0_23, %c0_24, %c0_25] : memref<1x1x1x128xf32, #tpu.memory_space<vmem>>, vector<1x1x1x128xf32>
      %32 = vector.shape_cast %31 : vector<1x1x1x128xf32> to vector<1x128xf32>
      %33 = vector.shape_cast %30 : vector<1x128xf32> to vector<1x1x1x128xf32>
      tpu.vector_store %arg7[%c0_22, %c0_23, %c0_24, %c0_25], %33 {strides = array<i32>} : memref<1x1x1x128xf32, #tpu.memory_space<vmem>>, vector<1x1x1x128xf32>,
    } else {
    }
    %c0 = arith.constant 0 : index
    %c0_1 = arith.constant 0 : index
    %c0_2 = arith.constant 0 : index
    %5 = vector.load %arg3[%c0, %c0_1, %c0_2] : memref<1x8x128xf32, #tpu.memory_space<vmem>>, vector<1x8x128xf32>
    %6 = vector.shape_cast %5 : vector<1x8x128xf32> to vector<8x128xf32>
    %7 = arith.negf %6 : vector<8x128xf32>
    %8 = math.exp %7 : vector<8x128xf32>
    %cst = arith.constant 1.000000e+00 : f32
    %9 = vector.broadcast %cst : f32 to vector<8x128xf32>
    %10 = arith.addf %9, %8 : vector<8x128xf32>
    %11 = arith.divf %9, %10 : vector<8x128xf32>
    %c0_3 = arith.constant 0 : index
    %c0_4 = arith.constant 0 : index
    %c0_5 = arith.constant 0 : index
    %12 = vector.load %arg4[%c0_3, %c0_4, %c0_5] : memref<1x8x128xf32, #tpu.memory_space<vmem>>, vector<1x8x128xf32>
    %13 = vector.shape_cast %12 : vector<1x8x128xf32> to vector<8x128xf32>
    %c8_i32 = arith.constant 8 : i32
    %14 = arith.muli %1, %c8_i32 : i32
    %c8_i32_6 = arith.constant 8 : i32
    %15 = arith.subi %c8_i32_6, %14 : i32
    %c8_i32_7 = arith.constant 8 : i32
    %16 = arith.cmpi sge, %15, %c8_i32_7 : i32
    %17 = arith.extui %16 : i1 to i32
    %c0_i32_8 = arith.constant 0 : i32
    %18 = arith.cmpi ne, %17, %c0_i32_8 : i32
    scf.if %18 {
      %c0_11 = arith.constant 0 : index
      %c0_12 = arith.constant 0 : index
      %c0_13 = arith.constant 0 : index
      %c0_14 = arith.constant 0 : index
      %22 = vector.load %arg5[%c0_11, %c0_12, %c0_13, %c0_14] : memref<1x1x1x128xf32, #tpu.memory_space<vmem>>, vector<1x1x1x128xf32>
      %23 = vector.shape_cast %22 : vector<1x1x1x128xf32> to vector<1x128xf32>
      %24 = arith.mulf %11, %13 : vector<8x128xf32>
      %cst_15 = arith.constant dense<0.000000e+00> : vector<128xf32>
      %25 = vector.multi_reduction <add>, %24, %cst_15 [0] : vector<8x128xf32> to vector<128xf32>
      %26 = vector.shape_cast %25 : vector<128xf32> to vector<1x128xf32>
      %27 = arith.addf %23, %26 : vector<1x128xf32>
      %c0_16 = arith.constant 0 : index
      %c0_17 = arith.constant 0 : index
      %c0_18 = arith.constant 0 : index
      %c0_19 = arith.constant 0 : index
      %28 = vector.load %arg5[%c0_16, %c0_17, %c0_18, %c0_19] : memref<1x1x1x128xf32, #tpu.memory_space<vmem>>, vector<1x1x1x128xf32>
      %29 = vector.shape_cast %28 : vector<1x1x1x128xf32> to vector<1x128xf32>
      %30 = vector.shape_cast %27 : vector<1x128xf32> to vector<1x1x1x128xf32>
      tpu.vector_store %arg5[%c0_16, %c0_17, %c0_18, %c0_19], %30 {strides = array<i32>} : memref<1x1x1x128xf32, #tpu.memory_space<vmem>>, vector<1x1x1x128xf32>,
      %c0_20 = arith.constant 0 : index
      %c0_21 = arith.constant 0 : index
      %c0_22 = arith.constant 0 : index
      %c0_23 = arith.constant 0 : index
      %31 = vector.load %arg6[%c0_20, %c0_21, %c0_22, %c0_23] : memref<1x1x1x128xf32, #tpu.memory_space<vmem>>, vector<1x1x1x128xf32>
      %32 = vector.shape_cast %31 : vector<1x1x1x128xf32> to vector<1x128xf32>
      %cst_24 = arith.constant dense<0.000000e+00> : vector<128xf32>
      %33 = vector.multi_reduction <add>, %11, %cst_24 [0] : vector<8x128xf32> to vector<128xf32>
      %34 = vector.shape_cast %33 : vector<128xf32> to vector<1x128xf32>
      %35 = arith.addf %32, %34 : vector<1x128xf32>
      %c0_25 = arith.constant 0 : index
      %c0_26 = arith.constant 0 : index
      %c0_27 = arith.constant 0 : index
      %c0_28 = arith.constant 0 : index
      %36 = vector.load %arg6[%c0_25, %c0_26, %c0_27, %c0_28] : memref<1x1x1x128xf32, #tpu.memory_space<vmem>>, vector<1x1x1x128xf32>
      %37 = vector.shape_cast %36 : vector<1x1x1x128xf32> to vector<1x128xf32>
      %38 = vector.shape_cast %35 : vector<1x128xf32> to vector<1x1x1x128xf32>
      tpu.vector_store %arg6[%c0_25, %c0_26, %c0_27, %c0_28], %38 {strides = array<i32>} : memref<1x1x1x128xf32, #tpu.memory_space<vmem>>, vector<1x1x1x128xf32>,
      %c0_29 = arith.constant 0 : index
      %c0_30 = arith.constant 0 : index
      %c0_31 = arith.constant 0 : index
      %c0_32 = arith.constant 0 : index
      %39 = vector.load %arg7[%c0_29, %c0_30, %c0_31, %c0_32] : memref<1x1x1x128xf32, #tpu.memory_space<vmem>>, vector<1x1x1x128xf32>
      %40 = vector.shape_cast %39 : vector<1x1x1x128xf32> to vector<1x128xf32>
      %cst_33 = arith.constant dense<0.000000e+00> : vector<128xf32>
      %41 = vector.multi_reduction <add>, %13, %cst_33 [0] : vector<8x128xf32> to vector<128xf32>
      %42 = vector.shape_cast %41 : vector<128xf32> to vector<1x128xf32>
      %43 = arith.addf %40, %42 : vector<1x128xf32>
      %c0_34 = arith.constant 0 : index
      %c0_35 = arith.constant 0 : index
      %c0_36 = arith.constant 0 : index
      %c0_37 = arith.constant 0 : index
      %44 = vector.load %arg7[%c0_34, %c0_35, %c0_36, %c0_37] : memref<1x1x1x128xf32, #tpu.memory_space<vmem>>, vector<1x1x1x128xf32>
      %45 = vector.shape_cast %44 : vector<1x1x1x128xf32> to vector<1x128xf32>
      %46 = vector.shape_cast %43 : vector<1x128xf32> to vector<1x1x1x128xf32>
      tpu.vector_store %arg7[%c0_34, %c0_35, %c0_36, %c0_37], %46 {strides = array<i32>} : memref<1x1x1x128xf32, #tpu.memory_space<vmem>>, vector<1x1x1x128xf32>,
    } else {
    }
    %c8_i32_9 = arith.constant 8 : i32
    %19 = arith.cmpi slt, %15, %c8_i32_9 : i32
    %20 = arith.extui %19 : i1 to i32
    %c0_i32_10 = arith.constant 0 : i32
    %21 = arith.cmpi ne, %20, %c0_i32_10 : i32
    scf.if %21 {
      %22 = tpu.iota {dimensions = array<i32: 0>} : vector<8x128xi32>
      %23 = vector.broadcast %15 : i32 to vector<8x128xi32>
      %24 = arith.cmpi slt, %22, %23 : vector<8x128xi32>
      %cst_11 = arith.constant 0.000000e+00 : f32
      %25 = vector.broadcast %cst_11 : f32 to vector<8x128xf32>
      %26 = arith.select %24, %11, %25 : vector<8x128xi1>, vector<8x128xf32>
      %cst_12 = arith.constant 0.000000e+00 : f32
      %27 = vector.broadcast %cst_12 : f32 to vector<8x128xf32>
      %28 = arith.select %24, %13, %27 : vector<8x128xi1>, vector<8x128xf32>
      %c0_13 = arith.constant 0 : index
      %c0_14 = arith.constant 0 : index
      %c0_15 = arith.constant 0 : index
      %c0_16 = arith.constant 0 : index
      %29 = vector.load %arg5[%c0_13, %c0_14, %c0_15, %c0_16] : memref<1x1x1x128xf32, #tpu.memory_space<vmem>>, vector<1x1x1x128xf32>
      %30 = vector.shape_cast %29 : vector<1x1x1x128xf32> to vector<1x128xf32>
      %31 = arith.mulf %26, %28 : vector<8x128xf32>
      %cst_17 = arith.constant dense<0.000000e+00> : vector<128xf32>
      %32 = vector.multi_reduction <add>, %31, %cst_17 [0] : vector<8x128xf32> to vector<128xf32>
      %33 = vector.shape_cast %32 : vector<128xf32> to vector<1x128xf32>
      %34 = arith.addf %30, %33 : vector<1x128xf32>
      %c0_18 = arith.constant 0 : index
      %c0_19 = arith.constant 0 : index
      %c0_20 = arith.constant 0 : index
      %c0_21 = arith.constant 0 : index
      %35 = vector.load %arg5[%c0_18, %c0_19, %c0_20, %c0_21] : memref<1x1x1x128xf32, #tpu.memory_space<vmem>>, vector<1x1x1x128xf32>
      %36 = vector.shape_cast %35 : vector<1x1x1x128xf32> to vector<1x128xf32>
      %37 = vector.shape_cast %34 : vector<1x128xf32> to vector<1x1x1x128xf32>
      tpu.vector_store %arg5[%c0_18, %c0_19, %c0_20, %c0_21], %37 {strides = array<i32>} : memref<1x1x1x128xf32, #tpu.memory_space<vmem>>, vector<1x1x1x128xf32>,
      %c0_22 = arith.constant 0 : index
      %c0_23 = arith.constant 0 : index
      %c0_24 = arith.constant 0 : index
      %c0_25 = arith.constant 0 : index
      %38 = vector.load %arg6[%c0_22, %c0_23, %c0_24, %c0_25] : memref<1x1x1x128xf32, #tpu.memory_space<vmem>>, vector<1x1x1x128xf32>
      %39 = vector.shape_cast %38 : vector<1x1x1x128xf32> to vector<1x128xf32>
      %cst_26 = arith.constant dense<0.000000e+00> : vector<128xf32>
      %40 = vector.multi_reduction <add>, %26, %cst_26 [0] : vector<8x128xf32> to vector<128xf32>
      %41 = vector.shape_cast %40 : vector<128xf32> to vector<1x128xf32>
      %42 = arith.addf %39, %41 : vector<1x128xf32>
      %c0_27 = arith.constant 0 : index
      %c0_28 = arith.constant 0 : index
      %c0_29 = arith.constant 0 : index
      %c0_30 = arith.constant 0 : index
      %43 = vector.load %arg6[%c0_27, %c0_28, %c0_29, %c0_30] : memref<1x1x1x128xf32, #tpu.memory_space<vmem>>, vector<1x1x1x128xf32>
      %44 = vector.shape_cast %43 : vector<1x1x1x128xf32> to vector<1x128xf32>
      %45 = vector.shape_cast %42 : vector<1x128xf32> to vector<1x1x1x128xf32>
      tpu.vector_store %arg6[%c0_27, %c0_28, %c0_29, %c0_30], %45 {strides = array<i32>} : memref<1x1x1x128xf32, #tpu.memory_space<vmem>>, vector<1x1x1x128xf32>,
      %c0_31 = arith.constant 0 : index
      %c0_32 = arith.constant 0 : index
      %c0_33 = arith.constant 0 : index
      %c0_34 = arith.constant 0 : index
      %46 = vector.load %arg7[%c0_31, %c0_32, %c0_33, %c0_34] : memref<1x1x1x128xf32, #tpu.memory_space<vmem>>, vector<1x1x1x128xf32>
      %47 = vector.shape_cast %46 : vector<1x1x1x128xf32> to vector<1x128xf32>
      %cst_35 = arith.constant dense<0.000000e+00> : vector<128xf32>
      %48 = vector.multi_reduction <add>, %28, %cst_35 [0] : vector<8x128xf32> to vector<128xf32>
      %49 = vector.shape_cast %48 : vector<128xf32> to vector<1x128xf32>
      %50 = arith.addf %47, %49 : vector<1x128xf32>
      %c0_36 = arith.constant 0 : index
      %c0_37 = arith.constant 0 : index
      %c0_38 = arith.constant 0 : index
      %c0_39 = arith.constant 0 : index
      %51 = vector.load %arg7[%c0_36, %c0_37, %c0_38, %c0_39] : memref<1x1x1x128xf32, #tpu.memory_space<vmem>>, vector<1x1x1x128xf32>
      %52 = vector.shape_cast %51 : vector<1x1x1x128xf32> to vector<1x128xf32>
      %53 = vector.shape_cast %50 : vector<1x128xf32> to vector<1x1x1x128xf32>
      tpu.vector_store %arg7[%c0_36, %c0_37, %c0_38, %c0_39], %53 {strides = array<i32>} : memref<1x1x1x128xf32, #tpu.memory_space<vmem>>, vector<1x1x1x128xf32>,
    } else {
    }
    return
  }
  func.func @transform_0(%arg0: i32, %arg1: i32, %arg2: i32) -> (i32, i32, i32) {
    %c1_i32 = arith.constant 1 : i32
    %0 = arith.muli %arg1, %c1_i32 : i32
    %1 = arith.addi %0, %arg2 : i32
    %c0_i32 = arith.constant 0 : i32
    %2 = arith.minsi %1, %c0_i32 : i32
    %c0_i32_0 = arith.constant 0 : i32
    %c0_i32_1 = arith.constant 0 : i32
    return %arg0, %2, %c0_i32_0 : i32, i32, i32
  }
  func.func @transform_1(%arg0: i32, %arg1: i32, %arg2: i32) -> (i32, i32, i32) {
    %c1_i32 = arith.constant 1 : i32
    %0 = arith.muli %arg1, %c1_i32 : i32
    %1 = arith.addi %0, %arg2 : i32
    %c0_i32 = arith.constant 0 : i32
    %2 = arith.minsi %1, %c0_i32 : i32
    %c0_i32_0 = arith.constant 0 : i32
    %c0_i32_1 = arith.constant 0 : i32
    return %arg0, %2, %c0_i32_0 : i32, i32, i32
  }
  func.func @transform_2(%arg0: i32, %arg1: i32, %arg2: i32) -> (i32, i32, i32, i32) {
    %c0_i32 = arith.constant 0 : i32
    %c0_i32_0 = arith.constant 0 : i32
    %c0_i32_1 = arith.constant 0 : i32
    return %arg0, %arg1, %c0_i32, %c0_i32_0 : i32, i32, i32, i32
  }
  func.func @transform_3(%arg0: i32, %arg1: i32, %arg2: i32) -> (i32, i32, i32, i32) {
    %c0_i32 = arith.constant 0 : i32
    %c0_i32_0 = arith.constant 0 : i32
    %c0_i32_1 = arith.constant 0 : i32
    return %arg0, %arg1, %c0_i32, %c0_i32_0 : i32, i32, i32, i32
  }
  func.func @transform_4(%arg0: i32, %arg1: i32, %arg2: i32) -> (i32, i32, i32, i32) {
    %c0_i32 = arith.constant 0 : i32
    %c0_i32_0 = arith.constant 0 : i32
    %c0_i32_1 = arith.constant 0 : i32
    return %arg0, %arg1, %c0_i32, %c0_i32_0 : i32, i32, i32, i32
  }
}

</mosaic_0001>

<llo_original>
// kernel: tpu_custom_call.1
$region0: #{tpu_custom_call.1}
  #allocation0 [shape = 'u32[]', space=smem, size = 0x4, offset = 0x4, fixed_abs, tag = 'smem constant byte address 0x4 - core index']
  #allocation1 [shape = 'u32[144,128]{1,0:T(1,128)}', space=vmem, size = 0x12000, scoped, tag = 'internal scratch']
  %s0 = inlined_call_operand.hbm [shape: f32[2,8,128], index: 0, kind: input, shape index: {}]
  %s1 = inlined_call_operand.hbm [shape: f32[2,8,128], index: 1, kind: input, shape index: {}]
  %s2 = inlined_call_operand.hbm [shape: f32[2,1,1,128], index: 2, kind: output, shape index: {0}]
  %s3 = inlined_call_operand.hbm [shape: f32[2,1,1,128], index: 3, kind: output, shape index: {1}]
  %s4 = inlined_call_operand.hbm [shape: f32[2,1,1,128], index: 4, kind: output, shape index: {2}]
  %5 = xla_tuple %s2, %s3, %s4
  %s6 = sld [smem:[#allocation0]]
  $region77: #{tpu_custom_call.1} parent=0
    _
  %s8 = ssub.s32 1, %s6
  %s9 = scalar_select 0, %s8, %s6
  $region1: #{tpu_custom_call.1} parent=0
    #allocation2 [shape = 'u8[8192]{0}', space=vmem, size = 0x2000, scoped, tag = 'input window, operand 0']
    #allocation3 [shape = 's32[2]{0}', space=sflag, size = 0x8, scoped, tag = 'scoped memory for tpu_custom_call.1']
    #allocation4 [shape = 's32[2]{0}', space=sflag, size = 0x8, scoped, tag = 'scoped memory for tpu_custom_call.1']
    #allocation5 [shape = 'u8[8192]{0}', space=vmem, size = 0x2000, scoped, tag = 'input window, operand 1']
    #allocation6 [shape = 's32[2]{0}', space=sflag, size = 0x8, scoped, tag = 'scoped memory for tpu_custom_call.1']
    #allocation7 [shape = 'u8[1024]{0}', space=vmem, size = 0x400, scoped, tag = 'output window, operand 0']
    #allocation8 [shape = 'u8[1024]{0}', space=vmem, size = 0x400, scoped, tag = 'output window, operand 1']
    #allocation9 [shape = 's32[2]{0}', space=sflag, size = 0x8, scoped, tag = 'scoped memory for tpu_custom_call.1']
    #allocation10 [shape = 'u8[1024]{0}', space=vmem, size = 0x400, scoped, tag = 'output window, operand 2']
    %10 = vsyncpa [#allocation3], 0
    %s11 = scalar_lea.sflag [#allocation3], 1
    %12 = vsyncpa %s11, 0
    %13 = vsyncpa [#allocation6], 0
    %s14 = scalar_lea.sflag [#allocation6], 1
    %15 = vsyncpa %s14, 0
    %16 = vsyncpa [#allocation4], 0
    %s17 = scalar_lea.sflag [#allocation4], 1
    %18 = vsyncpa %s17, 0
    %19 = vsyncpa [#allocation9], 0
    %s20 = scalar_lea.sflag [#allocation9], 1
    %21 = vsyncpa %s20, 0
    loop: start=0, step=1, limit=4
    $region2: #{tpu_custom_call.1} parent=1 // loop_pre_header
      _
    $region3: #{tpu_custom_call.1} parent=1 // loop_header
      %s23 = sphi 0, %s27
      %p24 = scmp.ge.s32.totalorder %s23, 4
      %s30 = sphi 0, %s49
      %s31 = sphi 0, %s45
      %s32 = sphi 0, %s41
      %s33 = sphi 0, %s30
      %s34 = sphi 0, %s31
      %s35 = sphi 0, %s32
      %s36 = sphi 0, %s33
      %s37 = sphi 0, %s34
      %s38 = sphi 0, %s35
      %s60 = sphi 0, %s62
      %s63 = sphi 0, %s60
      %s64 = sphi 0, %s63
      %s80 = sphi 0, %s64
      %s94 = sphi 0, %s96
      %s97 = sphi 0, %s94
      %s98 = sphi 0, %s97
      %s114 = sphi 0, %s98
      %s122 = sphi 0, %s124
      %s125 = sphi 0, %s122
      %s126 = sphi 0, %s125
      %s142 = sphi 0, %s126
      %s150 = sphi 0, %s152
      %s153 = sphi 0, %s150
      %s154 = sphi 0, %s153
      %s170 = sphi 0, %s154
      %s178 = sphi 0, %s180
      %s181 = sphi 0, %s178
      %s182 = sphi 0, %s181
      %s198 = sphi 0, %s182
    $region4: #{tpu_custom_call.1} parent=1 // loop_header_branch
      %26 = sbr.rel (%p24) target = $region8
    $region5: #{tpu_custom_call.1} parent=1 // loop_body
      %s28 = ssub.s32 %s23, 1
      %s29 = ssub.s32 %s23, 2
      %s39 = sadd.s32 1, %s32
      %p40 = scmp.ge.s32.totalorder %s39, 1
      %s41 = scalar_select %p40, 0, %s39
      %s42 = sadd.s32 1, %s31
      %s43 = scalar_select %p40, %s42, %s31
      %p44 = scmp.ge.s32.totalorder %s43, 1
      %s45 = scalar_select %p44, 0, %s43
      %s46 = sadd.s32 1, %s30
      %s47 = scalar_select %p44, %s46, %s30
      %p48 = scmp.ge.s32.totalorder %s47, 2
      %s49 = scalar_select %p48, 0, %s47
      %s50 = sadd.s32 %s31, %s32
      %p51 = scmp.lt.s32.totalorder %s50, 0
      %s52 = scalar_select %p51, %s50, 0
      %s53 = sadd.s32 %s45, %s41
      %p54 = scmp.lt.s32.totalorder %s53, 0
      %s55 = scalar_select %p54, %s53, 0
      %s56 = ssub.s32 %s30, %s49
      %s57 = ssub.s32 %s52, %s55
      %s58 = sor.u32 %s56, %s57
      %p59 = scmp.eq.s32.totalorder %s58, 0
      %s61 = sadd.s32 %s60, 1
      %s62 = scalar_select %p59, %s60, %s61
      %p65 = pneg %p59
      %p66 = scmp.eq.s32.totalorder %s23, 1
      %p67 = por %p65, %p66
      %p68 = scmp.ne.s32.totalorder %s60, %s63
      %p69 = scmp.eq.s32.totalorder %s23, 0
      %p70 = por %p68, %p69
      %p71 = scmp.ne.s32.totalorder %s60, %s63
      %p72 = scmp.eq.s32.totalorder %s28, 1
      %p73 = por %p71, %p72
      %p74 = scmp.ne.s32.totalorder %s63, %s64
      %p75 = scmp.eq.s32.totalorder %s28, 0
      %p76 = por %p74, %p75
      %p77 = scmp.ne.s32.totalorder %s63, %s64
      %p78 = scmp.eq.s32.totalorder %s29, 1
      %p79 = por %p77, %p78
      %p81 = scmp.ne.s32.totalorder %s64, %s80
      %p82 = scmp.eq.s32.totalorder %s29, 0
      %p83 = por %p81, %p82
      %s84 = sadd.s32 %s31, %s32
      %p85 = scmp.lt.s32.totalorder %s84, 0
      %s86 = scalar_select %p85, %s84, 0
      %s87 = sadd.s32 %s45, %s41
      %p88 = scmp.lt.s32.totalorder %s87, 0
      %s89 = scalar_select %p88, %s87, 0
      %s90 = ssub.s32 %s30, %s49
      %s91 = ssub.s32 %s86, %s89
      %s92 = sor.u32 %s90, %s91
      %p93 = scmp.eq.s32.totalorder %s92, 0
      %s95 = sadd.s32 %s94, 1
      %s96 = scalar_select %p93, %s94, %s95
      %p99 = pneg %p93
      %p100 = scmp.eq.s32.totalorder %s23, 1
      %p101 = por %p99, %p100
      %p102 = scmp.ne.s32.totalorder %s94, %s97
      %p103 = scmp.eq.s32.totalorder %s23, 0
      %p104 = por %p102, %p103
      %p105 = scmp.ne.s32.totalorder %s94, %s97
      %p106 = scmp.eq.s32.totalorder %s28, 1
      %p107 = por %p105, %p106
      %p108 = scmp.ne.s32.totalorder %s97, %s98
      %p109 = scmp.eq.s32.totalorder %s28, 0
      %p110 = por %p108, %p109
      %p111 = scmp.ne.s32.totalorder %s97, %s98
      %p112 = scmp.eq.s32.totalorder %s29, 1
      %p113 = por %p111, %p112
      %p115 = scmp.ne.s32.totalorder %s98, %s114
      %p116 = scmp.eq.s32.totalorder %s29, 0
      %p117 = por %p115, %p116
      %s118 = ssub.s32 %s30, %s49
      %s119 = ssub.s32 %s31, %s45
      %s120 = sor.u32 %s118, %s119
      %p121 = scmp.eq.s32.totalorder %s120, 0
      %s123 = sadd.s32 %s122, 1
      %s124 = scalar_select %p121, %s122, %s123
      %p127 = pneg %p121
      %p128 = scmp.eq.s32.totalorder %s23, 1
      %p129 = por %p127, %p128
      %p130 = scmp.ne.s32.totalorder %s122, %s125
      %p131 = scmp.eq.s32.totalorder %s23, 0
      %p132 = por %p130, %p131
      %p133 = scmp.ne.s32.totalorder %s122, %s125
      %p134 = scmp.eq.s32.totalorder %s28, 1
      %p135 = por %p133, %p134
      %p136 = scmp.ne.s32.totalorder %s125, %s126
      %p137 = scmp.eq.s32.totalorder %s28, 0
      %p138 = por %p136, %p137
      %p139 = scmp.ne.s32.totalorder %s125, %s126
      %p140 = scmp.eq.s32.totalorder %s29, 1
      %p141 = por %p139, %p140
      %p143 = scmp.ne.s32.totalorder %s126, %s142
      %p144 = scmp.eq.s32.totalorder %s29, 0
      %p145 = por %p143, %p144
      %s146 = ssub.s32 %s30, %s49
      %s147 = ssub.s32 %s31, %s45
      %s148 = sor.u32 %s146, %s147
      %p149 = scmp.eq.s32.totalorder %s148, 0
      %s151 = sadd.s32 %s150, 1
      %s152 = scalar_select %p149, %s150, %s151
      %p155 = pneg %p149
      %p156 = scmp.eq.s32.totalorder %s23, 1
      %p157 = por %p155, %p156
      %p158 = scmp.ne.s32.totalorder %s150, %s153
      %p159 = scmp.eq.s32.totalorder %s23, 0
      %p160 = por %p158, %p159
      %p161 = scmp.ne.s32.totalorder %s150, %s153
      %p162 = scmp.eq.s32.totalorder %s28, 1
      %p163 = por %p161, %p162
      %p164 = scmp.ne.s32.totalorder %s153, %s154
      %p165 = scmp.eq.s32.totalorder %s28, 0
      %p166 = por %p164, %p165
      %p167 = scmp.ne.s32.totalorder %s153, %s154
      %p168 = scmp.eq.s32.totalorder %s29, 1
      %p169 = por %p167, %p168
      %p171 = scmp.ne.s32.totalorder %s154, %s170
      %p172 = scmp.eq.s32.totalorder %s29, 0
      %p173 = por %p171, %p172
      %s174 = ssub.s32 %s30, %s49
      %s175 = ssub.s32 %s31, %s45
      %s176 = sor.u32 %s174, %s175
      %p177 = scmp.eq.s32.totalorder %s176, 0
      %s179 = sadd.s32 %s178, 1
      %s180 = scalar_select %p177, %s178, %s179
      %p183 = pneg %p177
      %p184 = scmp.eq.s32.totalorder %s23, 1
      %p185 = por %p183, %p184
      %p186 = scmp.ne.s32.totalorder %s178, %s181
      %p187 = scmp.eq.s32.totalorder %s23, 0
      %p188 = por %p186, %p187
      %p189 = scmp.ne.s32.totalorder %s178, %s181
      %p190 = scmp.eq.s32.totalorder %s28, 1
      %p191 = por %p189, %p190
      %p192 = scmp.ne.s32.totalorder %s181, %s182
      %p193 = scmp.eq.s32.totalorder %s28, 0
      %p194 = por %p192, %p193
      %p195 = scmp.ne.s32.totalorder %s181, %s182
      %p196 = scmp.eq.s32.totalorder %s29, 1
      %p197 = por %p195, %p196
      %p199 = scmp.ne.s32.totalorder %s182, %s198
      %p200 = scmp.eq.s32.totalorder %s29, 0
      %p201 = por %p199, %p200
      %p202 = scmp.le.s32.totalorder 1, %s23
      %p203 = scmp.lt.s32.totalorder %s23, 3
      %p204 = pnand %p202, %p203
      %p205 = pneg %p204
      // Predicated region
      $region9: #{tpu_custom_call.1} parent=5 // pred_check
        _
      $region10: #{tpu_custom_call.1} parent=5 // pred_check_branch
        %207 = sbr.rel (%p204) target = $region12
      $region11: #{tpu_custom_call.1} parent=5 // pred_region
        %s208 = ssub.s32 %s23, 1
      $region12: #{tpu_custom_call.1} parent=5 // pred_fallthru
        _
      %p209 = scmp.lt.s32.totalorder %s23, 2
      // Predicated region
      $region13: #{tpu_custom_call.1} parent=5 // pred_check
        %p210 = pneg %p209
      $region14: #{tpu_custom_call.1} parent=5 // pred_check_branch
        %212 = sbr.rel (%p210) target = $region16
      $region15: #{tpu_custom_call.1} parent=5 // pred_region
        // Predicated region
        $region17: #{tpu_custom_call.1} parent=15 // pred_check
          %p213 = pneg %p70
        $region18: #{tpu_custom_call.1} parent=15 // pred_check_branch
          %215 = sbr.rel (%p213) target = $region20
        $region19: #{tpu_custom_call.1} parent=15 // pred_region
          %s216 = sand.u32 %s60, 1
          %s217 = scalar_lea.sflag [#allocation3], %s216
          %s218 = sand.u32 %s60, 1
          %s219 = smul.addr %s218, 8
          %s220 = scalar_lea.vmem [#allocation2], %s219
          %s221 = sadd.s32 %s31, %s32
          %p222 = scmp.lt.s32.totalorder %s221, 0
          %s223 = scalar_select %p222, %s221, 0
          %s225 = ssub.s32 128, 128
          %226 = vsyncadd %s217, %s225
          %s227 = sadd.s32 %s223, %s30
          %s228 = smul.addr %s227, 128
          %s229 = scalar_lea.hbm %s0, %s228
          %s231 = sshll.u32 %s220, 4
          %s232 = int_to_ptr.vmem [resolvable:$true] %s231
          %234 = dma.hbm_to_vmem [thread:$0]  %s229, 128, %s232, %s217
        $region20: #{tpu_custom_call.1} parent=15 // pred_fallthru
          _
        // Predicated region
        $region21: #{tpu_custom_call.1} parent=15 // pred_check
          %p235 = pneg %p104
        $region22: #{tpu_custom_call.1} parent=15 // pred_check_branch
          %237 = sbr.rel (%p235) target = $region24
        $region23: #{tpu_custom_call.1} parent=15 // pred_region
          %s238 = sand.u32 %s94, 1
          %s239 = scalar_lea.sflag [#allocation6], %s238
          %s240 = sand.u32 %s94, 1
          %s241 = smul.addr %s240, 8
          %s242 = scalar_lea.vmem [#allocation5], %s241
          %s243 = sadd.s32 %s31, %s32
          %p244 = scmp.lt.s32.totalorder %s243, 0
          %s245 = scalar_select %p244, %s243, 0
          %s247 = ssub.s32 128, 128
          %248 = vsyncadd %s239, %s247
          %s249 = sadd.s32 %s245, %s30
          %s250 = smul.addr %s249, 128
          %s251 = scalar_lea.hbm %s1, %s250
          %s253 = sshll.u32 %s242, 4
          %s254 = int_to_ptr.vmem [resolvable:$true] %s253
          %256 = dma.hbm_to_vmem [thread:$0]  %s251, 128, %s254, %s239
        $region24: #{tpu_custom_call.1} parent=15 // pred_fallthru
          _
      $region16: #{tpu_custom_call.1} parent=5 // pred_fallthru
        _
      %p257 = scmp.le.s32.totalorder 1, %s23
      %p258 = scmp.lt.s32.totalorder %s23, 3
      %p259 = pnand %p257, %p258
      %p260 = pneg %p259
      // Predicated region
      $region25: #{tpu_custom_call.1} parent=5 // pred_check
        _
      $region26: #{tpu_custom_call.1} parent=5 // pred_check_branch
        %262 = sbr.rel (%p259) target = $region28
      $region27: #{tpu_custom_call.1} parent=5 // pred_region
        %s263 = ssub.s32 %s23, 1
        %s264 = sand.u32 %s63, 1
        %s265 = scalar_lea.sflag [#allocation3], %s264
        %s266 = sand.u32 %s63, 1
        %s267 = smul.addr %s266, 8
        %s268 = scalar_lea.vmem [#allocation2], %s267
        // Predicated region
        $region29: #{tpu_custom_call.1} parent=27 // pred_check
          %p269 = pneg %p76
        $region30: #{tpu_custom_call.1} parent=27 // pred_check_branch
          %271 = sbr.rel (%p269) target = $region32
        $region31: #{tpu_custom_call.1} parent=27 // pred_region
          %272 = dma.done %s265, 128
        $region32: #{tpu_custom_call.1} parent=27 // pred_fallthru
          _
        %s273 = sand.u32 %s97, 1
        %s274 = scalar_lea.sflag [#allocation6], %s273
        %s275 = sand.u32 %s97, 1
        %s276 = smul.addr %s275, 8
        %s277 = scalar_lea.vmem [#allocation5], %s276
        // Predicated region
        $region33: #{tpu_custom_call.1} parent=27 // pred_check
          %p278 = pneg %p110
        $region34: #{tpu_custom_call.1} parent=27 // pred_check_branch
          %280 = sbr.rel (%p278) target = $region36
        $region35: #{tpu_custom_call.1} parent=27 // pred_region
          %281 = dma.done %s274, 128
        $region36: #{tpu_custom_call.1} parent=27 // pred_fallthru
          _
        %s282 = sand.u32 %s63, 1
        %s283 = scalar_lea.sflag [#allocation3], %s282
        %s284 = sand.u32 %s63, 1
        %s285 = smul.addr %s284, 8
        %s286 = scalar_lea.vmem [#allocation2], %s285
        %p287 = pneg %p76
        %p288 = pneg %p73
        %s289 = sand.u32 %s97, 1
        %s290 = scalar_lea.sflag [#allocation6], %s289
        %s291 = sand.u32 %s97, 1
        %s292 = smul.addr %s291, 8
        %s293 = scalar_lea.vmem [#allocation5], %s292
        %p294 = pneg %p110
        %p295 = pneg %p107
        %p296 = pneg %p138
        %p297 = pneg %p135
        %s298 = sand.u32 %s125, 1
        %s299 = scalar_lea.sflag [#allocation4], %s298
        %s300 = sand.u32 %s125, 1
        %s301 = scalar_lea.vmem [#allocation7], %s300
        %p302 = pneg %p166
        %p303 = pneg %p163
        %s304 = sand.u32 %s28, 1
        %s305 = scalar_lea.sflag [#allocation9], %s304
        %s306 = sand.u32 %s153, 1
        %s307 = scalar_lea.vmem [#allocation8], %s306
        %p308 = pneg %p194
        %p309 = pneg %p191
        %s310 = sand.u32 %s28, 1
        %s311 = scalar_lea.sflag [#allocation9], %s310
        %s312 = sand.u32 %s181, 1
        %s313 = scalar_lea.vmem [#allocation10], %s312
        %s314 = sadd.s32 %s34, %s35
        %p315 = scmp.lt.s32.totalorder %s314, 0
        %s316 = scalar_select %p315, %s314, 0
        %s317 = sadd.s32 %s34, %s35
        %p318 = scmp.lt.s32.totalorder %s317, 0
        %s319 = scalar_select %p318, %s317, 0
        %s320 = sadd.s32 %s34, %s35
        %p321 = scmp.eq.s32.totalorder %s35, 0
        // Predicated region
        $region37: #{tpu_custom_call.1} parent=27 // pred_check
          %p322 = pneg %p321
        $region38: #{tpu_custom_call.1} parent=27 // pred_check_branch
          %324 = sbr.rel (%p322) target = $region40
        $region39: #{tpu_custom_call.1} parent=27 // pred_region
          %325 = vst [vmem:[%s301] sm:$0x1] 0.0
          %326 = vst [vmem:[%s307] sm:$0x1] 0.0
          %327 = vst [vmem:[%s313] sm:$0x1] 0.0
        $region40: #{tpu_custom_call.1} parent=27 // pred_fallthru
          _
        %v328 = vld [vmem:[%s268] sm:$0xff]
        %v329 = vxor.u32 %v328, 2147483648
        %v330 = vmul.f32 %v329, 1.442695
        %v331 = vpow.pop %v330
        %v332 = vadd.f32 %v331, 1.0
        %v333 = vrcp.pop %v332
        %v334 = vmul.f32 1.0, %v333
        %v335 = vld [vmem:[%s277] sm:$0xff]
        %s336 = smul.u32 %s320, 8
        %s337 = ssub.s32 8, %s336
        %p338 = scmp.ge.s32.totalorder %s337, 8
        // Predicated region
        $region41: #{tpu_custom_call.1} parent=27 // pred_check
          %p339 = pneg %p338
        $region42: #{tpu_custom_call.1} parent=27 // pred_check_branch
          %341 = sbr.rel (%p339) target = $region44
        $region43: #{tpu_custom_call.1} parent=27 // pred_region
          %v342 = vld [vmem:[%s301] sm:$0x1]
          %v343 = vmul.f32 %v334, %v335
          %v344 = vrot.slane %v343, 4
          %v345 = vadd.f32 %v343, %v344
          %v346 = vrot.slane %v345, 2
          %v347 = vadd.f32 %v345, %v346
          %v348 = vrot.slane %v347, 1
          %v349 = vadd.f32 %v347, %v348
          %v350 = vadd.f32 %v342, %v349
          %351 = vst [vmem:[%s301] sm:$0x1] %v350
          %v352 = vld [vmem:[%s307] sm:$0x1]
          %v353 = vrot.slane %v334, 4
          %v354 = vadd.f32 %v334, %v353
          %v355 = vrot.slane %v354, 2
          %v356 = vadd.f32 %v354, %v355
          %v357 = vrot.slane %v356, 1
          %v358 = vadd.f32 %v356, %v357
          %v359 = vadd.f32 %v352, %v358
          %360 = vst [vmem:[%s307] sm:$0x1] %v359
          %v361 = vld [vmem:[%s313] sm:$0x1]
          %v362 = vrot.slane %v335, 4
          %v363 = vadd.f32 %v335, %v362
          %v364 = vrot.slane %v363, 2
          %v365 = vadd.f32 %v363, %v364
          %v366 = vrot.slane %v365, 1
          %v367 = vadd.f32 %v365, %v366
          %v368 = vadd.f32 %v361, %v367
          %369 = vst [vmem:[%s313] sm:$0x1] %v368
        $region44: #{tpu_custom_call.1} parent=27 // pred_fallthru
          _
        %p370 = scmp.lt.s32.totalorder %s337, 8
        // Predicated region
        $region45: #{tpu_custom_call.1} parent=27 // pred_check
          %p371 = pneg %p370
        $region46: #{tpu_custom_call.1} parent=27 // pred_check_branch
          %373 = sbr.rel (%p371) target = $region48
        $region47: #{tpu_custom_call.1} parent=27 // pred_region
          %v374 = vlaneseq
          %v375 = vshrl.u32 %v374, 7
          %v376 = vstv %s337
          %vm377 = vcmp.lt.s32.totalorder %v375, %v376
          %v378 = vsel %vm377, %v334, 0.0
          %v379 = vsel %vm377, %v335, 0.0
          %v380 = vld [vmem:[%s301] sm:$0x1]
          %v381 = vmul.f32 %v378, %v379
          %v382 = vrot.slane %v381, 4
          %v383 = vadd.f32 %v381, %v382
          %v384 = vrot.slane %v383, 2
          %v385 = vadd.f32 %v383, %v384
          %v386 = vrot.slane %v385, 1
          %v387 = vadd.f32 %v385, %v386
          %v388 = vadd.f32 %v380, %v387
          %389 = vst [vmem:[%s301] sm:$0x1] %v388
          %v390 = vld [vmem:[%s307] sm:$0x1]
          %v391 = vrot.slane %v378, 4
          %v392 = vadd.f32 %v378, %v391
          %v393 = vrot.slane %v392, 2
          %v394 = vadd.f32 %v392, %v393
          %v395 = vrot.slane %v394, 1
          %v396 = vadd.f32 %v394, %v395
          %v397 = vadd.f32 %v390, %v396
          %398 = vst [vmem:[%s307] sm:$0x1] %v397
          %v399 = vld [vmem:[%s313] sm:$0x1]
          %v400 = vrot.slane %v379, 4
          %v401 = vadd.f32 %v379, %v400
          %v402 = vrot.slane %v401, 2
          %v403 = vadd.f32 %v401, %v402
          %v404 = vrot.slane %v403, 1
          %v405 = vadd.f32 %v403, %v404
          %v406 = vadd.f32 %v399, %v405
          %407 = vst [vmem:[%s313] sm:$0x1] %v406
        $region48: #{tpu_custom_call.1} parent=27 // pred_fallthru
          _
        %s408 = sand.u32 %s125, 1
        %s409 = scalar_lea.sflag [#allocation4], %s408
        %s410 = sand.u32 %s125, 1
        %s411 = scalar_lea.vmem [#allocation7], %s410
        %s412 = sand.u32 %s28, 1
        %s413 = scalar_lea.sflag [#allocation9], %s412
        %s414 = sand.u32 %s153, 1
        %s415 = scalar_lea.vmem [#allocation8], %s414
        %s416 = sand.u32 %s28, 1
        %s417 = scalar_lea.sflag [#allocation9], %s416
        %s418 = sand.u32 %s181, 1
        %s419 = scalar_lea.vmem [#allocation10], %s418
        // Predicated region
        $region49: #{tpu_custom_call.1} parent=27 // pred_check
          %p420 = pneg %p135
        $region50: #{tpu_custom_call.1} parent=27 // pred_check_branch
          %422 = sbr.rel (%p420) target = $region52
        $region51: #{tpu_custom_call.1} parent=27 // pred_region
          %s424 = ssub.s32 16, 16
          %425 = vsyncadd %s409, %s424
          %s426 = sadd.s32 %s34, %s33
          %s427 = smul.addr %s426, 16
          %s428 = scalar_lea.hbm %s2, %s427
          %s430 = sshll.u32 %s411, 4
          %s431 = int_to_ptr.vmem [resolvable:$true] %s430
          %433 = dma.vmem_to_hbm [thread:$0]  %s431, 16, %s428, %s409
        $region52: #{tpu_custom_call.1} parent=27 // pred_fallthru
          _
        // Predicated region
        $region53: #{tpu_custom_call.1} parent=27 // pred_check
          %p434 = pneg %p163
        $region54: #{tpu_custom_call.1} parent=27 // pred_check_branch
          %436 = sbr.rel (%p434) target = $region56
        $region55: #{tpu_custom_call.1} parent=27 // pred_region
          %s438 = ssub.s32 16, 16
          %439 = vsyncadd %s413, %s438
          %s440 = sadd.s32 %s34, %s33
          %s441 = smul.addr %s440, 16
          %s442 = scalar_lea.hbm %s3, %s441
          %s444 = sshll.u32 %s415, 4
          %s445 = int_to_ptr.vmem [resolvable:$true] %s444
          %447 = dma.vmem_to_hbm [thread:$0]  %s445, 16, %s442, %s413
        $region56: #{tpu_custom_call.1} parent=27 // pred_fallthru
          _
        // Predicated region
        $region57: #{tpu_custom_call.1} parent=27 // pred_check
          %p448 = pneg %p191
        $region58: #{tpu_custom_call.1} parent=27 // pred_check_branch
          %450 = sbr.rel (%p448) target = $region60
        $region59: #{tpu_custom_call.1} parent=27 // pred_region
          %s452 = ssub.s32 16, 16
          %453 = vsyncadd %s417, %s452
          %s454 = sadd.s32 %s34, %s33
          %s455 = smul.addr %s454, 16
          %s456 = scalar_lea.hbm %s4, %s455
          %s458 = sshll.u32 %s419, 4
          %s459 = int_to_ptr.vmem [resolvable:$true] %s458
          %461 = dma.vmem_to_hbm [thread:$0]  %s459, 16, %s456, %s417
        $region60: #{tpu_custom_call.1} parent=27 // pred_fallthru
          _
      $region28: #{tpu_custom_call.1} parent=5 // pred_fallthru
        _
      %p462 = scmp.le.s32.totalorder 2, %s23
      // Predicated region
      $region61: #{tpu_custom_call.1} parent=5 // pred_check
        %p463 = pneg %p462
      $region62: #{tpu_custom_call.1} parent=5 // pred_check_branch
        %465 = sbr.rel (%p463) target = $region64
      $region63: #{tpu_custom_call.1} parent=5 // pred_region
        %s466 = ssub.s32 %s23, 2
        // Predicated region
        $region65: #{tpu_custom_call.1} parent=63 // pred_check
          %p467 = pneg %p141
        $region66: #{tpu_custom_call.1} parent=63 // pred_check_branch
          %469 = sbr.rel (%p467) target = $region68
        $region67: #{tpu_custom_call.1} parent=63 // pred_region
          %s470 = sand.u32 %s126, 1
          %s471 = scalar_lea.sflag [#allocation4], %s470
          %s472 = sand.u32 %s126, 1
          %s473 = scalar_lea.vmem [#allocation7], %s472
          %474 = dma.done %s471, 16
        $region68: #{tpu_custom_call.1} parent=63 // pred_fallthru
          _
        // Predicated region
        $region69: #{tpu_custom_call.1} parent=63 // pred_check
          %p475 = pneg %p169
        $region70: #{tpu_custom_call.1} parent=63 // pred_check_branch
          %477 = sbr.rel (%p475) target = $region72
        $region71: #{tpu_custom_call.1} parent=63 // pred_region
          %s478 = sand.u32 %s29, 1
          %s479 = scalar_lea.sflag [#allocation9], %s478
          %s480 = sand.u32 %s154, 1
          %s481 = scalar_lea.vmem [#allocation8], %s480
          %482 = dma.done %s479, 16
        $region72: #{tpu_custom_call.1} parent=63 // pred_fallthru
          _
        // Predicated region
        $region73: #{tpu_custom_call.1} parent=63 // pred_check
          %p483 = pneg %p197
        $region74: #{tpu_custom_call.1} parent=63 // pred_check_branch
          %485 = sbr.rel (%p483) target = $region76
        $region75: #{tpu_custom_call.1} parent=63 // pred_region
          %s486 = sand.u32 %s29, 1
          %s487 = scalar_lea.sflag [#allocation9], %s486
          %s488 = sand.u32 %s182, 1
          %s489 = scalar_lea.vmem [#allocation10], %s488
          %490 = dma.done %s487, 16
        $region76: #{tpu_custom_call.1} parent=63 // pred_fallthru
          _
      $region64: #{tpu_custom_call.1} parent=5 // pred_fallthru
        _
    $region6: #{tpu_custom_call.1} parent=1 // loop_footer
      %s27 = sadd.s32 1, %s23
    $region7: #{tpu_custom_call.1} parent=1 // loop_footer_branch
      %22 = sbr.rel target = $region3
    $region8: #{tpu_custom_call.1} parent=1 // loop_exit
      _
    %491 = vsyncpa [#allocation3], 1
    %s492 = scalar_lea.sflag [#allocation3], 1
    %493 = vsyncpa %s492, 1
    %494 = vsyncpa [#allocation6], 1
    %s495 = scalar_lea.sflag [#allocation6], 1
    %496 = vsyncpa %s495, 1
    %497 = vsyncpa [#allocation4], 1
    %s498 = scalar_lea.sflag [#allocation4], 1
    %499 = vsyncpa %s498, 1
    %500 = vsyncpa [#allocation9], 1
    %s501 = scalar_lea.sflag [#allocation9], 1
    %502 = vsyncpa %s501, 1

</llo_original>
